<compile_context>
chip_gen: v5e
topology: v5e:2x2
jax: 0.10.0
libtpu: 0.0.40
codegen_flags: <defaults>
</compile_context>

<pallas_src>
import functools

import jax
import jax.numpy as jnp
from jax.experimental import pallas as pl
from jax.experimental.pallas import tpu as pltpu


def _round_up(x, m):
    return (x + m - 1) // m * m


def _cdiv(a, b):
    return (a + b - 1) // b


def resid_linear_kernel(x_ref, w_ref, b_ref, o_ref, *, valid_d):
    """One batch tile of tanh(x @ W^T + b + x).

    x_ref: (tm, Dp) input tile, f32 (feature lanes >= valid_d are exact zeros).
    w_ref: (Dp, Dp) zero-padded W^T, VMEM-resident, MXU compute dtype.
    b_ref: (1, Dp)  zero-padded bias, f32, VMEM-resident.
    o_ref: (tm, valid_d) output tile (partial batch rows / unaligned tail
           lanes are masked by Pallas on store).
    """
    x = x_ref[...]
    # MXU matmul with f32 accumulation.  The cast is a no-op for f32 weights.
    y = jnp.dot(x.astype(w_ref.dtype), w_ref[...],
                preferred_element_type=jnp.float32)
    # Epilogue once per tile: bias (VPU) + residual from the ORIGINAL f32 x
    # (no double rounding when the MXU operands are bf16) + tanh (EUP slot).
    y = jnp.tanh(y + b_ref[...] + x.astype(jnp.float32))
    o_ref[...] = y[:, :valid_d].astype(o_ref.dtype)


def prepare_resid_linear_params(w, b, *, compute_dtype=None):
    """One-time parameter prep -- hoist this out of the forward/training step.

    w: (D, D) PyTorch nn.Linear weight layout (n_out, n_in);  b: (D,).
    Returns (w_t, bias_row): W^T zero-padded to (Dp, Dp) in `compute_dtype`
    (Dp = round_up(D, 128)) and the bias as a zero-padded (1, Dp) f32 row.
    Pass compute_dtype=jnp.bfloat16 for bf16 MXU operands (halves resident
    VMEM and the one-time W DMA on every TPU generation; accumulation stays
    f32, at the cost of bf16 rounding of the GEMM inputs).
    """
    n_out, n_in = w.shape
    assert n_in == n_out, "ResidLinear residual requires n_in == n_out"
    if compute_dtype is None:
        compute_dtype = w.dtype
    d = n_in
    dp = _round_up(d, 128)
    w_t = jnp.pad(w.T.astype(compute_dtype), ((0, dp - d), (0, dp - d)))
    bias_row = jnp.pad(b.astype(jnp.float32), (0, dp - d)).reshape(1, dp)
    return w_t, bias_row


def resid_linear(x, w_t, bias_row, *, tile_m=512, out_dtype=None):
    """ResidLinear forward: tanh(x @ W^T + b + x).

    x: (B, D).  w_t / bias_row: outputs of prepare_resid_linear_params.
    """
    B, D = x.shape
    Dp = w_t.shape[0]
    assert w_t.shape == (Dp, Dp) and bias_row.shape == (1, Dp)
    assert D <= Dp < D + 128, "w_t/bias_row were prepared for a different D"
    if out_dtype is None:
        out_dtype = x.dtype
    x_item = jnp.dtype(x.dtype).itemsize
    o_item = jnp.dtype(out_dtype).itemsize
    w_bytes = Dp * Dp * jnp.dtype(w_t.dtype).itemsize   # single-buffered
    b_bytes = Dp * 4                                     # single-buffered

    # Zero-pad ONLY the feature dim of x (and only when D % 128 != 0) so the
    # padded K lanes are exact zeros in the MXU contraction.  No batch padding.
    xp = x if Dp == D else jnp.pad(x, ((0, 0), (0, Dp - D)))

    # ---- batch tile choice -------------------------------------------------
    if B <= 8:
        tm = B                                    # single tile, full batch dim
    else:
        tm = max(8, min(tile_m, B) // 8 * 8)      # 8-aligned, never > B
        if B >= 16:
            # Guarantee >= 2 grid steps so the "parallel" axis can shard
            # across v7x's two TensorCores (one extra ~0.35us step elsewhere).
            tm = min(tm, _round_up(_cdiv(B, 2), 8))

    # Shrink the tile until the VMEM plan fits this chip with headroom.
    try:
        vmem_cap = pltpu.get_tpu_info().vmem_capacity_bytes
    except Exception:
        vmem_cap = 64 << 20                       # conservative (v7x per-TC)
    budget = max(vmem_cap - (8 << 20), 16 << 20)

    def vmem_plan(tm_):
        # resident W^T + bias (1 buffer each) + double-buffered x and out tiles
        return w_bytes + b_bytes + 2 * tm_ * Dp * (x_item + o_item)

    while tm > 8 and vmem_plan(tm) > budget:
        tm = max(8, (tm // 2) // 8 * 8)
    grid_m = _cdiv(B, tm)
    vmem_needed = vmem_plan(tm)
    # TODO(synk): if w_bytes alone exceeds `budget` (very large D), switch to a
    # W^T-streaming grid (N and/or K axis + f32 accumulator scratch).

    cp_kwargs = dict(dimension_semantics=("parallel",))
    if vmem_needed > (12 << 20):   # above v5e's ~16 MiB default scoped limit
        cp_kwargs["vmem_limit_bytes"] = int(
            min(vmem_needed * 1.3 + (2 << 20), vmem_cap - (4 << 20)))

    cost = pl.CostEstimate(
        flops=2 * B * D * D,
        transcendentals=B * D,
        bytes_accessed=B * Dp * x_item + B * D * o_item + w_bytes + b_bytes,
    )

    resident = pl.Buffered(1)   # constant index_map -> one DMA, one buffer

    return pl.pallas_call(
        functools.partial(resid_linear_kernel, valid_d=D),
        out_shape=jax.ShapeDtypeStruct((B, D), out_dtype),
        grid_spec=pltpu.PrefetchScalarGridSpec(
            num_scalar_prefetch=0,
            grid=(grid_m,),
            in_specs=[
                pl.BlockSpec((tm, Dp), lambda i: (i, 0)),       # x, streamed
                pl.BlockSpec((Dp, Dp), lambda i: (0, 0),
                             pipeline_mode=resident),           # W^T, resident
                pl.BlockSpec((1, Dp), lambda i: (0, 0),
                             pipeline_mode=resident),           # bias, resident
            ],
            out_specs=pl.BlockSpec((tm, D), lambda i: (i, 0)),
        ),
        compiler_params=pltpu.CompilerParams(**cp_kwargs),
        cost_estimate=cost,
    )(xp, w_t, bias_row)


def resid_linear_from_weights(x, w, b, *, compute_dtype=None, **kwargs):
    """Convenience wrapper (does the W^T prep per call -- prefer hoisting)."""
    w_t, bias_row = prepare_resid_linear_params(w, b, compute_dtype=compute_dtype)
    return resid_linear(x, w_t, bias_row, **kwargs)


if __name__ == "__main__":
    key = jax.random.PRNGKey(0)
    keys = jax.random.split(key, 9)

    # --- 1. Small shape consistent with the module (n_in == n_out == 32) ----
    B, D = 8, 32
    bound = 1.0 / (D ** 0.5)
    W = jax.random.uniform(keys[0], (D, D), jnp.float32, -bound, bound)  # (n_out, n_in)
    bias = jax.random.uniform(keys[1], (D,), jnp.float32, -bound, bound)
    x = jax.random.normal(keys[2], (B, D), jnp.float32)

    w_t, b_row = prepare_resid_linear_params(W, bias)            # hoisted prep
    out = jax.block_until_ready(resid_linear(x, w_t, b_row))
    ref = jnp.tanh(x @ W.T + bias + x)
    assert out.shape == (B, D)
    assert jnp.allclose(out, ref, atol=1e-5, rtol=1e-5), "small-shape mismatch"

    # --- 2. Non-aligned shape: partial batch tile + padded feature lanes ----
    B2, D2 = 300, 200
    bound2 = 1.0 / (D2 ** 0.5)
    W2 = jax.random.uniform(keys[3], (D2, D2), jnp.float32, -bound2, bound2)
    bias2 = jax.random.uniform(keys[4], (D2,), jnp.float32, -bound2, bound2)
    x2 = jax.random.normal(keys[5], (B2, D2), jnp.float32)

    w_t2, b_row2 = prepare_resid_linear_params(W2, bias2)
    out2 = jax.block_until_ready(resid_linear(x2, w_t2, b_row2))
    ref2 = jnp.tanh(x2 @ W2.T + bias2 + x2)
    assert jnp.allclose(out2, ref2, atol=2e-5, rtol=2e-5), "tiled-shape mismatch"

    # --- 3. Lane-aligned shape: fully dense, zero-pad-free path -------------
    B3, D3 = 256, 256
    bound3 = 1.0 / (D3 ** 0.5)
    W3 = jax.random.uniform(keys[6], (D3, D3), jnp.float32, -bound3, bound3)
    bias3 = jax.random.uniform(keys[7], (D3,), jnp.float32, -bound3, bound3)
    x3 = jax.random.normal(keys[8], (B3, D3), jnp.float32)

    w_t3, b_row3 = prepare_resid_linear_params(W3, bias3)
    out3 = jax.block_until_ready(resid_linear(x3, w_t3, b_row3))
    ref3 = jnp.tanh(x3 @ W3.T + bias3 + x3)
    assert jnp.allclose(out3, ref3, atol=5e-5, rtol=5e-5), "aligned-shape mismatch"

    # --- 4. bf16 MXU operands (optional fast path; f32 residual/epilogue) ---
    w_t2b, b_row2b = prepare_resid_linear_params(W2, bias2,
                                                 compute_dtype=jnp.bfloat16)
    out2b = jax.block_until_ready(resid_linear(x2, w_t2b, b_row2b))
    assert jnp.allclose(out2b, ref2, atol=2e-2, rtol=2e-2), "bf16-path mismatch"

    print("KERNEL_OK")
</pallas_src>

<mosaic_0001>
module attributes {stable_mosaic.version = 11 : i64} {
  func.func @resid_linear_kernel(%arg0: i32, %arg1: memref<8x128xf32, #tpu.memory_space<vmem>>, %arg2: memref<128x128xf32, #tpu.memory_space<vmem>>, %arg3: memref<1x128xf32, #tpu.memory_space<vmem>>, %arg4: memref<8x32xf32, #tpu.memory_space<vmem>>) attributes {dimension_semantics = [#tpu.dimension_semantics<parallel>], iteration_bounds = array<i64: 1>, scalar_prefetch = 0 : i64, scratch_operands = 0 : i64, tpu.core_type = #tpu.core_type<tc>, window_params = [{transform_indices = @transform_0, window_bounds = array<i64: 8, 128>}, {pipeline_mode = #tpu.pipeline_mode<synchronous>, transform_indices = @transform_1, window_bounds = array<i64: 128, 128>}, {pipeline_mode = #tpu.pipeline_mode<synchronous>, transform_indices = @transform_2, window_bounds = array<i64: 1, 128>}, {transform_indices = @transform_3, window_bounds = array<i64: 8, 32>}]} {
    %c0 = arith.constant 0 : index
    %c0_0 = arith.constant 0 : index
    %0 = vector.load %arg1[%c0, %c0_0] : memref<8x128xf32, #tpu.memory_space<vmem>>, vector<8x128xf32>
    %c0_1 = arith.constant 0 : index
    %c0_2 = arith.constant 0 : index
    %1 = vector.load %arg2[%c0_1, %c0_2] : memref<128x128xf32, #tpu.memory_space<vmem>>, vector<128x128xf32>
    %cst = arith.constant dense<0.000000e+00> : vector<8x128xf32>
    %2 = tpu.matmul %0, %1, %cst {dimension_numbers = #tpu.dot_dimension_numbers<[1], [0], [0], [1], [0, 0, 1, 1], [], []>} : vector<8x128xf32>, vector<128x128xf32>, vector<8x128xf32> -> vector<8x128xf32>
    %c0_3 = arith.constant 0 : index
    %c0_4 = arith.constant 0 : index
    %3 = vector.load %arg3[%c0_3, %c0_4] : memref<1x128xf32, #tpu.memory_space<vmem>>, vector<1x128xf32>
    %4 = vector.broadcast %3 : vector<1x128xf32> to vector<8x128xf32>
    %5 = arith.addf %2, %4 : vector<8x128xf32>
    %6 = arith.addf %5, %0 : vector<8x128xf32>
    %7 = math.tanh %6 : vector<8x128xf32>
    %8 = vector.extract_strided_slice %7 {offsets = [0, 0], sizes = [8, 32], strides = [1, 1]} : vector<8x128xf32> to vector<8x32xf32>
    %c0_5 = arith.constant 0 : index
    %c0_6 = arith.constant 0 : index
    %9 = vector.load %arg4[%c0_5, %c0_6] : memref<8x32xf32, #tpu.memory_space<vmem>>, vector<8x32xf32>
    tpu.vector_store %arg4[%c0_5, %c0_6], %8 {strides = array<i32>} : memref<8x32xf32, #tpu.memory_space<vmem>>, vector<8x32xf32>,
    return
  }
  func.func @transform_0(%arg0: i32) -> (i32, i32) {
    %c0_i32 = arith.constant 0 : i32
    %c0_i32_0 = arith.constant 0 : i32
    return %arg0, %c0_i32 : i32, i32
  }
  func.func @transform_1(%arg0: i32) -> (i32, i32) {
    %c0_i32 = arith.constant 0 : i32
    %c0_i32_0 = arith.constant 0 : i32
    %c0_i32_1 = arith.constant 0 : i32
    return %c0_i32, %c0_i32_0 : i32, i32
  }
  func.func @transform_2(%arg0: i32) -> (i32, i32) {
    %c0_i32 = arith.constant 0 : i32
    %c0_i32_0 = arith.constant 0 : i32
    %c0_i32_1 = arith.constant 0 : i32
    return %c0_i32, %c0_i32_0 : i32, i32
  }
  func.func @transform_3(%arg0: i32) -> (i32, i32) {
    %c0_i32 = arith.constant 0 : i32
    %c0_i32_0 = arith.constant 0 : i32
    return %arg0, %c0_i32 : i32, i32
  }
}

</mosaic_0001>

<llo_original>
// kernel: tpu_custom_call.1
$region0: #{tpu_custom_call.1}
  #allocation0 [shape = 'u32[]', space=smem, size = 0x4, offset = 0x4, fixed_abs, tag = 'smem constant byte address 0x4 - core index']
  #allocation1 [shape = 'u32[72,128]{1,0:T(1,128)}', space=vmem, size = 0x9000, scoped, tag = 'internal scratch']
  %s0 = inlined_call_operand.hbm [shape: f32[8,128], index: 0, kind: input, shape index: {}]
  %s1 = inlined_call_operand.hbm [shape: f32[128,128], index: 1, kind: input, shape index: {}]
  %s2 = inlined_call_operand.vmem [shape: f32[1,128], index: 2, kind: input, shape index: {}]
  %s3 = inlined_call_operand.hbm [shape: f32[8,32], index: 3, kind: output, shape index: {}]
  %s4 = sld [smem:[#allocation0]]
  $region30: #{tpu_custom_call.1} parent=0
    _
  %s6 = ssub.s32 1, %s4
  %s7 = scalar_select 0, %s6, %s4
  $region1: #{tpu_custom_call.1} parent=0
    #allocation2 [shape = 'u8[4096]{0}', space=vmem, size = 0x1000, scoped, tag = 'input window, operand 0, single buffered']
    #allocation3 [shape = 's32[1]{0}', space=sflag, size = 0x4, scoped, tag = 'scoped memory for tpu_custom_call.1']
    #allocation4 [shape = 's32[1]{0}', space=sflag, size = 0x4, scoped, tag = 'scoped memory for tpu_custom_call.1']
    #allocation5 [shape = 'u8[65536]{0}', space=vmem, size = 0x10000, scoped, tag = 'input window, operand 1, single buffered']
    #allocation6 [shape = 's32[1]{0}', space=sflag, size = 0x4, scoped, tag = 'scoped memory for tpu_custom_call.1']
    #allocation7 [shape = 'u8[4096]{0}', space=vmem, size = 0x1000, scoped, tag = 'output window, operand 0, single buffered']
    %8 = vsyncpa [#allocation3], 0
    %9 = vsyncpa [#allocation6], 0
    %10 = vsyncpa [#allocation4], 0
    // Predicated region
    $region2: #{tpu_custom_call.1} parent=1 // pred_check
      _
    $region3: #{tpu_custom_call.1} parent=1 // pred_check_branch
      %12 = sbr.rel (0) target = $region5
    $region4: #{tpu_custom_call.1} parent=1 // pred_region
      %14 = vsyncadd [#allocation3], 0
      %s16 = sshll.u32 %s0, 4
      %s17 = int_to_ptr.hbm [resolvable:$true] %s16
      %s18 = sshll.u32 [#allocation2], 4
      %s19 = int_to_ptr.vmem [resolvable:$true] %s18
      %21 = dma.hbm_to_vmem [thread:$0]  %s17, 128, %s19, [#allocation3]
    $region5: #{tpu_custom_call.1} parent=1 // pred_fallthru
      _
    // Predicated region
    $region6: #{tpu_custom_call.1} parent=1 // pred_check
      _
    $region7: #{tpu_custom_call.1} parent=1 // pred_check_branch
      %23 = sbr.rel (0) target = $region9
    $region8: #{tpu_custom_call.1} parent=1 // pred_region
      %25 = vsyncadd [#allocation6], 0
      %s26 = sshll.u32 %s1, 4
      %s27 = int_to_ptr.hbm [resolvable:$true] %s26
      %s28 = sshll.u32 [#allocation5], 4
      %s29 = int_to_ptr.vmem [resolvable:$true] %s28
      %34 = dma.hbm_to_vmem [thread:$0]  %s27, 2048, %s29, [#allocation6], 128, 128, 8
    $region9: #{tpu_custom_call.1} parent=1 // pred_fallthru
      _
    // Predicated region
    $region10: #{tpu_custom_call.1} parent=1 // pred_check
      _
    $region11: #{tpu_custom_call.1} parent=1 // pred_check_branch
      %36 = sbr.rel (0) target = $region13
    $region12: #{tpu_custom_call.1} parent=1 // pred_region
      _
    $region13: #{tpu_custom_call.1} parent=1 // pred_fallthru
      _
    // Predicated region
    $region14: #{tpu_custom_call.1} parent=1 // pred_check
      _
    $region15: #{tpu_custom_call.1} parent=1 // pred_check_branch
      %38 = sbr.rel (0) target = $region17
    $region16: #{tpu_custom_call.1} parent=1 // pred_region
      %40 = dma.done [#allocation3], 128
    $region17: #{tpu_custom_call.1} parent=1 // pred_fallthru
      _
    // Predicated region
    $region18: #{tpu_custom_call.1} parent=1 // pred_check
      _
    $region19: #{tpu_custom_call.1} parent=1 // pred_check_branch
      %42 = sbr.rel (0) target = $region21
    $region20: #{tpu_custom_call.1} parent=1 // pred_region
      %44 = dma.done [#allocation6], 2048
    $region21: #{tpu_custom_call.1} parent=1 // pred_fallthru
      _
    %v45 = vld [vmem:[#allocation2] sm:$0xff]
    %v46 = vld [vmem:[#allocation5] sm:$0xff]
    %v47 = vld [vmem:[#allocation5 + $0x8] sm:$0xff]
    %v48 = vld [vmem:[#allocation5 + $0x10] sm:$0xff]
    %v49 = vld [vmem:[#allocation5 + $0x18] sm:$0xff]
    %v50 = vld [vmem:[#allocation5 + $0x20] sm:$0xff]
    %v51 = vld [vmem:[#allocation5 + $0x28] sm:$0xff]
    %v52 = vld [vmem:[#allocation5 + $0x30] sm:$0xff]
    %v53 = vld [vmem:[#allocation5 + $0x38] sm:$0xff]
    %v54 = vld [vmem:[#allocation5 + $0x40] sm:$0xff]
    %v55 = vld [vmem:[#allocation5 + $0x48] sm:$0xff]
    %v56 = vld [vmem:[#allocation5 + $0x50] sm:$0xff]
    %v57 = vld [vmem:[#allocation5 + $0x58] sm:$0xff]
    %v58 = vld [vmem:[#allocation5 + $0x60] sm:$0xff]
    %v59 = vld [vmem:[#allocation5 + $0x68] sm:$0xff]
    %v60 = vld [vmem:[#allocation5 + $0x70] sm:$0xff]
    %v61 = vld [vmem:[#allocation5 + $0x78] sm:$0xff]
    %v62 = vld [vmem:[%s2] sm:$0x1]
    %v64 = vperm.slane %v62, 0
    %66 = vmatpush.msra.mxu0 %v61
    %67 = vmatpush.msra.mxu0 %v60
    %68 = vmatpush.msra.mxu0 %v59
    %69 = vmatpush.msra.mxu0 %v58
    %70 = vmatpush.msra.mxu0 %v57
    %71 = vmatpush.msra.mxu0 %v56
    %72 = vmatpush.msra.mxu0 %v55
    %73 = vmatpush.msra.mxu0 %v54
    %74 = vmatpush.msra.mxu0 %v53
    %75 = vmatpush.msra.mxu0 %v52
    %76 = vmatpush.msra.mxu0 %v51
    %77 = vmatpush.msra.mxu0 %v50
    %78 = vmatpush.msra.mxu0 %v49
    %79 = vmatpush.msra.mxu0 %v48
    %80 = vmatpush.msra.mxu0 %v47
    %81 = vmatpush.msra.mxu0 %v46
    %82 = vmatmul.f32.gmra.mxu0 %v45
    %v83 = vpop.f32.mrf.mxu0
    %v84 = vadd.f32 %v64, %v83
    %85 = vdwg.mxu0
    %v86 = vadd.f32 %v84, %v45
    %v87 = vtanh.pop %v86
    %vm88 = vcmask 261120
    %89 = vst.msk [vmem:[#allocation7] sm:$0xff] %vm88, %v87
    // Predicated region
    $region22: #{tpu_custom_call.1} parent=1 // pred_check
      _
    $region23: #{tpu_custom_call.1} parent=1 // pred_check_branch
      %91 = sbr.rel (0) target = $region25
    $region24: #{tpu_custom_call.1} parent=1 // pred_region
      %93 = vsyncadd [#allocation4], 0
      %s95 = sshll.u32 [#allocation7], 4
      %s96 = int_to_ptr.vmem [resolvable:$true] %s95
      %s97 = sshll.u32 %s3, 4
      %s98 = int_to_ptr.hbm [resolvable:$true] %s97
      %100 = dma.vmem_to_hbm [thread:$0]  %s96, 128, %s98, [#allocation4]
    $region25: #{tpu_custom_call.1} parent=1 // pred_fallthru
      _
    // Predicated region
    $region26: #{tpu_custom_call.1} parent=1 // pred_check
      _
    $region27: #{tpu_custom_call.1} parent=1 // pred_check_branch
      %102 = sbr.rel (0) target = $region29
    $region28: #{tpu_custom_call.1} parent=1 // pred_region
      %104 = dma.done [#allocation4], 128
    $region29: #{tpu_custom_call.1} parent=1 // pred_fallthru
      _
    %105 = vsyncpa [#allocation3], 1
    %106 = vsyncpa [#allocation6], 1
    %107 = vsyncpa [#allocation4], 1

</llo_original>
